<compile_context>
chip_gen: v6e
topology: v6e:2x2x1
jax: 0.10.0
libtpu: 0.0.40
codegen_flags: <defaults>
</compile_context>

<pallas_src>
import math

import jax
import jax.numpy as jnp
from jax.experimental import pallas as pl
from jax.experimental.pallas import tpu as pltpu


def _linear_kernel(x_ref, w_ref, b_ref, o_ref):
    # x_ref: (TM, C), w_ref: (C, L), b_ref: (1, L), o_ref: (TM, L)
    acc = jnp.dot(x_ref[...], w_ref[...], preferred_element_type=jnp.float32)
    o_ref[...] = (acc + b_ref[...]).astype(o_ref.dtype)


def point_weather_embed(x, w_t, bias, *, tm=4096, out_dtype=None,
                        vmem_budget_bytes=20 * 1024 * 1024):
    """Linear projection on the last axis (PointWeatherEmbed.forward).

    x    : (B, T, C)
    w_t  : (C, L)   nn.Linear weight, pre-transposed once at init
    bias : (L,)

    Returns (B, T, L) in `out_dtype`.  `out_dtype` defaults to x.dtype (so
    f32 inputs give the module's f32 output); pass jnp.bfloat16 to halve the
    dominant HBM writeback when the consumer tolerates it.
    """
    B, T, C = x.shape
    Cw, L = w_t.shape
    assert Cw == C, f"weight in_channels {Cw} != x channels {C}"
    out_dtype = jnp.dtype(x.dtype if out_dtype is None else out_dtype)
    x_dtype = jnp.dtype(x.dtype)

    M = B * T
    x_flat = x.reshape(M, C)
    b2 = bias.reshape(1, L)

    # --- row-tile selection -------------------------------------------------
    # Per-row VMEM cost of the pipelined buffers (last dim lane-padded to 128,
    # x2 for default double buffering).
    lanes_x = max(128, ((C + 127) // 128) * 128)
    lanes_o = ((L + 127) // 128) * 128
    row_bytes = 2 * (lanes_x * x_dtype.itemsize + lanes_o * out_dtype.itemsize)
    tm_cap = max(8, (vmem_budget_bytes // row_bytes) // 8 * 8)
    tm = max(8, min(tm, tm_cap))
    # Don't over-tile tiny inputs (tm must stay a multiple of 8).
    tm = min(tm, ((M + 7) // 8) * 8)

    grid = (pl.cdiv(M, tm),)  # partial edge block handled (masked) by Pallas

    cost = pl.CostEstimate(
        flops=2 * M * C * L,
        transcendentals=0,
        bytes_accessed=(M * C * x_dtype.itemsize
                        + C * L * jnp.dtype(w_t.dtype).itemsize
                        + L * jnp.dtype(bias.dtype).itemsize
                        + M * L * out_dtype.itemsize),
    )

    y_flat = pl.pallas_call(
        _linear_kernel,
        out_shape=jax.ShapeDtypeStruct((M, L), out_dtype),
        grid=grid,
        in_specs=[
            # Narrow (tm, C) x tile; its DMA hides under the output writeback.
            pl.BlockSpec((tm, C), lambda i: (i, 0)),
            # Weight / bias stay resident across the whole grid
            # (full-extent last dim -> no L padding, masked tail store only).
            pl.BlockSpec((C, L), lambda i: (0, 0)),
            pl.BlockSpec((1, L), lambda i: (0, 0)),
        ],
        out_specs=pl.BlockSpec((tm, L), lambda i: (i, 0)),
        compiler_params=pltpu.CompilerParams(
            dimension_semantics=("parallel",),      # v7x: 2 TCs split M tiles
            vmem_limit_bytes=32 * 1024 * 1024),
        cost_estimate=cost,
    )(x_flat, w_t, b2)

    return y_flat.reshape(B, T, L)


def init_params(key, in_channels, token_dim):
    """PyTorch-style nn.Linear init; weight returned pre-transposed as (C, L)."""
    kw, kb = jax.random.split(key)
    bound = 1.0 / math.sqrt(in_channels)
    weight = jax.random.uniform(
        kw, (token_dim, in_channels), jnp.float32, minval=-bound, maxval=bound)
    bias = jax.random.uniform(
        kb, (token_dim,), jnp.float32, minval=-bound, maxval=bound)
    return weight.T, bias  # (C, L), (L,)  -- transpose done ONCE at init


if __name__ == "__main__":
    key = jax.random.PRNGKey(0)
    kx, kp, kx2, kp2 = jax.random.split(key, 4)

    # --- Test 1: module-like shapes (C=5), lane-aligned token_dim ----------
    B, T, C = 2, 8, 5
    L = 128
    x = jax.random.normal(kx, (B, T, C), dtype=jnp.float32)
    w_t, bias = init_params(kp, C, L)

    y = point_weather_embed(x, w_t, bias)
    y = jax.block_until_ready(y)
    y_ref = x @ w_t + bias
    assert y.shape == (B, T, L)
    assert y.dtype == jnp.float32
    assert jnp.allclose(y, y_ref, atol=1e-5, rtol=1e-5)

    # --- Test 2: partial edge block (M % tm != 0) and non-128-aligned L -----
    B2, T2, C2 = 2, 100, 5        # M=200, tm=64 -> grid=(4,), last block masked
    L2 = 160                       # not 128-aligned -> masked tail store, no pad
    x2 = jax.random.normal(kx2, (B2, T2, C2), dtype=jnp.float32)
    w_t2, bias2 = init_params(kp2, C2, L2)

    y2 = point_weather_embed(x2, w_t2, bias2, tm=64)
    y2 = jax.block_until_ready(y2)
    y2_ref = x2 @ w_t2 + bias2
    assert y2.shape == (B2, T2, L2)
    assert jnp.allclose(y2, y2_ref, atol=1e-5, rtol=1e-5)

    # --- Test 3: recommended bf16 writeback path ----------------------------
    y3 = point_weather_embed(x, w_t, bias, out_dtype=jnp.bfloat16)
    y3 = jax.block_until_ready(y3)
    assert y3.dtype == jnp.bfloat16
    assert jnp.allclose(y3.astype(jnp.float32), y_ref, atol=2e-2, rtol=2e-2)

    print("KERNEL_OK")
</pallas_src>

<mosaic_0001>
module attributes {stable_mosaic.version = 11 : i64} {
  func.func @_linear_kernel(%arg0: i32, %arg1: memref<16x5xf32, #tpu.memory_space<vmem>>, %arg2: memref<5x128xf32, #tpu.memory_space<vmem>>, %arg3: memref<1x128xf32, #tpu.memory_space<vmem>>, %arg4: memref<16x128xf32, #tpu.memory_space<vmem>>) attributes {dimension_semantics = [#tpu.dimension_semantics<parallel>], iteration_bounds = array<i64: 1>, scalar_prefetch = 0 : i64, scratch_operands = 0 : i64, tpu.core_type = #tpu.core_type<tc>, window_params = [{transform_indices = @transform_0, window_bounds = array<i64: 16, 5>}, {pipeline_mode = #tpu.pipeline_mode<synchronous>, transform_indices = @transform_1, window_bounds = array<i64: 5, 128>}, {pipeline_mode = #tpu.pipeline_mode<synchronous>, transform_indices = @transform_2, window_bounds = array<i64: 1, 128>}, {transform_indices = @transform_3, window_bounds = array<i64: 16, 128>}]} {
    %c0 = arith.constant 0 : index
    %c0_0 = arith.constant 0 : index
    %0 = vector.load %arg1[%c0, %c0_0] : memref<16x5xf32, #tpu.memory_space<vmem>>, vector<16x5xf32>
    %c0_1 = arith.constant 0 : index
    %c0_2 = arith.constant 0 : index
    %1 = vector.load %arg2[%c0_1, %c0_2] : memref<5x128xf32, #tpu.memory_space<vmem>>, vector<5x128xf32>
    %cst = arith.constant dense<0.000000e+00> : vector<16x128xf32>
    %2 = tpu.matmul %0, %1, %cst {dimension_numbers = #tpu.dot_dimension_numbers<[1], [0], [0], [1], [0, 0, 1, 1], [], []>} : vector<16x5xf32>, vector<5x128xf32>, vector<16x128xf32> -> vector<16x128xf32>
    %c0_3 = arith.constant 0 : index
    %c0_4 = arith.constant 0 : index
    %3 = vector.load %arg3[%c0_3, %c0_4] : memref<1x128xf32, #tpu.memory_space<vmem>>, vector<1x128xf32>
    %4 = vector.broadcast %3 : vector<1x128xf32> to vector<16x128xf32>
    %5 = arith.addf %2, %4 : vector<16x128xf32>
    %c0_5 = arith.constant 0 : index
    %c0_6 = arith.constant 0 : index
    %6 = vector.load %arg4[%c0_5, %c0_6] : memref<16x128xf32, #tpu.memory_space<vmem>>, vector<16x128xf32>
    tpu.vector_store %arg4[%c0_5, %c0_6], %5 {strides = array<i32>} : memref<16x128xf32, #tpu.memory_space<vmem>>, vector<16x128xf32>,
    return
  }
  func.func @transform_0(%arg0: i32) -> (i32, i32) {
    %c0_i32 = arith.constant 0 : i32
    %c0_i32_0 = arith.constant 0 : i32
    return %arg0, %c0_i32 : i32, i32
  }
  func.func @transform_1(%arg0: i32) -> (i32, i32) {
    %c0_i32 = arith.constant 0 : i32
    %c0_i32_0 = arith.constant 0 : i32
    %c0_i32_1 = arith.constant 0 : i32
    return %c0_i32, %c0_i32_0 : i32, i32
  }
  func.func @transform_2(%arg0: i32) -> (i32, i32) {
    %c0_i32 = arith.constant 0 : i32
    %c0_i32_0 = arith.constant 0 : i32
    %c0_i32_1 = arith.constant 0 : i32
    return %c0_i32, %c0_i32_0 : i32, i32
  }
  func.func @transform_3(%arg0: i32) -> (i32, i32) {
    %c0_i32 = arith.constant 0 : i32
    %c0_i32_0 = arith.constant 0 : i32
    return %arg0, %c0_i32 : i32, i32
  }
}

</mosaic_0001>

<llo_original>
// kernel: tpu_custom_call.1
$region0: #{tpu_custom_call.1}
  #allocation0 [shape = 'u32[]', space=smem, size = 0x4, offset = 0x4, fixed_abs, tag = 'smem constant byte address 0x4 - core index']
  #allocation1 [shape = 'u32[144,128]{1,0:T(1,128)}', space=vmem, size = 0x12000, scoped, tag = 'internal scratch']
  %s0 = inlined_call_operand.vmem [shape: f32[16,5], index: 0, kind: input, shape index: {}]
  %s1 = inlined_call_operand.vmem [shape: f32[5,128], index: 1, kind: input, shape index: {}]
  %s2 = inlined_call_operand.vmem [shape: f32[1,128], index: 2, kind: input, shape index: {}]
  %s3 = inlined_call_operand.hbm [shape: f32[16,128], index: 3, kind: output, shape index: {}]
  %s4 = sld [smem:[#allocation0]]
  $region22: #{tpu_custom_call.1} parent=0
    _
  %s6 = ssub.s32 1, %s4
  %s7 = scalar_select 0, %s6, %s4
  $region1: #{tpu_custom_call.1} parent=0
    #allocation2 [shape = 'u8[8192]{0}', space=vmem, size = 0x2000, scoped, tag = 'output window, operand 0, single buffered']
    #allocation3 [shape = 's32[1]{0}', space=sflag, size = 0x4, scoped, tag = 'scoped memory for tpu_custom_call.1']
    %8 = vsyncpa [#allocation3], 0
    // Predicated region
    $region2: #{tpu_custom_call.1} parent=1 // pred_check
      _
    $region3: #{tpu_custom_call.1} parent=1 // pred_check_branch
      %10 = sbr.rel (0) target = $region5
    $region4: #{tpu_custom_call.1} parent=1 // pred_region
      _
    $region5: #{tpu_custom_call.1} parent=1 // pred_fallthru
      _
    // Predicated region
    $region6: #{tpu_custom_call.1} parent=1 // pred_check
      _
    $region7: #{tpu_custom_call.1} parent=1 // pred_check_branch
      %12 = sbr.rel (0) target = $region9
    $region8: #{tpu_custom_call.1} parent=1 // pred_region
      _
    $region9: #{tpu_custom_call.1} parent=1 // pred_fallthru
      _
    // Predicated region
    $region10: #{tpu_custom_call.1} parent=1 // pred_check
      _
    $region11: #{tpu_custom_call.1} parent=1 // pred_check_branch
      %14 = sbr.rel (0) target = $region13
    $region12: #{tpu_custom_call.1} parent=1 // pred_region
      _
    $region13: #{tpu_custom_call.1} parent=1 // pred_fallthru
      _
    %v15 = vld [vmem:[%s0] sm:$0xff]
    %v16 = vld [vmem:[%s0 + $0x8] sm:$0xff]
    %v17 = vld [vmem:[%s1] sm:$0x1f]
    %v18 = vld [vmem:[%s2] sm:$0x1]
    %v20 = vlaneseq
    %v21 = vshrl.u32 %v20, 7
    %v22 = vsub.s32 0, %v21
    %v23 = vrot.slane %v18, %v22
    %vm25 = vcmask 39936
    %v27 = vsel %vm25, %v15, 0
    %v30 = vsel %vm25, %v16, 0
    %vm32 = vcmask 1044480
    %v34 = vsel %vm32, %v17, 0
    %36 = vmatprep.subr.mxu0 0.0
    %37 = vmatpush1.msra.mxu0 0.0
    %38 = vmatprep.subr.mxu0 0.0
    %39 = vmatpush1.msra.mxu0 0.0
    %40 = vmatprep.subr.mxu0 0.0
    %41 = vmatpush1.msra.mxu0 0.0
    %42 = vmatprep.subr.mxu0 0.0
    %43 = vmatpush1.msra.mxu0 0.0
    %44 = vmatprep.subr.mxu0 0.0
    %45 = vmatpush1.msra.mxu0 0.0
    %46 = vmatprep.subr.mxu0 0.0
    %47 = vmatpush1.msra.mxu0 0.0
    %48 = vmatprep.subr.mxu0 0.0
    %49 = vmatpush1.msra.mxu0 0.0
    %50 = vmatprep.subr.mxu0 0.0
    %51 = vmatpush1.msra.mxu0 0.0
    %52 = vmatprep.subr.mxu0 0.0
    %53 = vmatpush1.msra.mxu0 0.0
    %54 = vmatprep.subr.mxu0 0.0
    %55 = vmatpush1.msra.mxu0 0.0
    %56 = vmatprep.subr.mxu0 0.0
    %57 = vmatpush1.msra.mxu0 0.0
    %58 = vmatprep.subr.mxu0 0.0
    %59 = vmatpush1.msra.mxu0 0.0
    %60 = vmatprep.subr.mxu0 0.0
    %61 = vmatpush1.msra.mxu0 0.0
    %62 = vmatprep.subr.mxu0 0.0
    %63 = vmatpush1.msra.mxu0 0.0
    %64 = vmatprep.subr.mxu0 0.0
    %65 = vmatpush1.msra.mxu0 0.0
    %66 = vmatprep.subr.mxu0 0.0
    %67 = vmatpush1.msra.mxu0 %v34
    %68 = vmatprep.subr.mxu0 0.0
    %69 = vmatpush2.msra.mxu0 0.0
    %70 = vmatprep.subr.mxu0 0.0
    %71 = vmatpush2.msra.mxu0 0.0
    %72 = vmatprep.subr.mxu0 0.0
    %73 = vmatpush2.msra.mxu0 0.0
    %74 = vmatprep.subr.mxu0 0.0
    %75 = vmatpush2.msra.mxu0 0.0
    %76 = vmatprep.subr.mxu0 0.0
    %77 = vmatpush2.msra.mxu0 0.0
    %78 = vmatprep.subr.mxu0 0.0
    %79 = vmatpush2.msra.mxu0 0.0
    %80 = vmatprep.subr.mxu0 0.0
    %81 = vmatpush2.msra.mxu0 0.0
    %82 = vmatprep.subr.mxu0 0.0
    %83 = vmatpush2.msra.mxu0 0.0
    %84 = vmatprep.subr.mxu0 0.0
    %85 = vmatpush2.msra.mxu0 0.0
    %86 = vmatprep.subr.mxu0 0.0
    %87 = vmatpush2.msra.mxu0 0.0
    %88 = vmatprep.subr.mxu0 0.0
    %89 = vmatpush2.msra.mxu0 0.0
    %90 = vmatprep.subr.mxu0 0.0
    %91 = vmatpush2.msra.mxu0 0.0
    %92 = vmatprep.subr.mxu0 0.0
    %93 = vmatpush2.msra.mxu0 0.0
    %94 = vmatprep.subr.mxu0 0.0
    %95 = vmatpush2.msra.mxu0 0.0
    %96 = vmatprep.subr.mxu0 0.0
    %97 = vmatpush2.msra.mxu0 0.0
    %98 = vmatprep.subr.mxu0 0.0
    %99 = vmatpush2.msra.mxu0 0.0
    %100 = vmatprep.mubr.f32.mxu0 0.0
    %101 = vmatmul.mubr.f32.gmra.mxu0 %v27
    %v102 = vpop.f32.mrf.mxu0
    %v103 = vadd.f32 %v23, %v102
    %v104 = vpop.f32.mrf.mxu0
    %105 = vmatprep.mubr.f32.mxu0 0.0
    %106 = vmatmul.mubr.f32.gmra.mxu0 %v30
    %v107 = vpop.f32.mrf.mxu0
    %v108 = vadd.f32 %v23, %v107
    %v109 = vpop.f32.mrf.mxu0
    %110 = vdwg.mxu0
    %111 = vst [vmem:[#allocation2] sm:$0xff] %v103
    %112 = vst [vmem:[#allocation2 + $0x8] sm:$0xff] %v108
    // Predicated region
    $region14: #{tpu_custom_call.1} parent=1 // pred_check
      _
    $region15: #{tpu_custom_call.1} parent=1 // pred_check_branch
      %114 = sbr.rel (0) target = $region17
    $region16: #{tpu_custom_call.1} parent=1 // pred_region
      %s116 = ssub.s32 256, 256
      %117 = vsyncadd [#allocation3], %s116
      %s118 = sshll.u32 [#allocation2], 4
      %s119 = int_to_ptr.vmem [resolvable:$true] %s118
      %124 = dma.vmem_to_hbm [thread:$0]  %s119, 256, %s3, [#allocation3], 128, 128, 8
    $region17: #{tpu_custom_call.1} parent=1 // pred_fallthru
      _
    // Predicated region
    $region18: #{tpu_custom_call.1} parent=1 // pred_check
      _
    $region19: #{tpu_custom_call.1} parent=1 // pred_check_branch
      %126 = sbr.rel (0) target = $region21
    $region20: #{tpu_custom_call.1} parent=1 // pred_region
      %127 = dma.done [#allocation3], 256
    $region21: #{tpu_custom_call.1} parent=1 // pred_fallthru
      _
    %128 = vsyncpa [#allocation3], 1

</llo_original>
